<compile_context>
chip_gen: v5e
topology: v5e:2x2
jax: 0.10.0
libtpu: 0.0.40
codegen_flags: <defaults>
</compile_context>

<pallas_src>
import functools

import jax
import jax.numpy as jnp
from jax.experimental import pallas as pl
from jax.experimental.pallas import tpu as pltpu


def _round_up(a, m):
    return (a + m - 1) // m * m


def _node_features_kernel(ux_ref, vx_ref, eg_ref, o_ref, num_sc, den_sc=None,
                          *, aggregation):
    # ux_ref: (1, TI, H)     resident across the j (reduction) axis
    # vx_ref: (1, TJ, H)     V-projected features for this neighbor tile
    # eg_ref: (1, TI, TJ, H) streamed edge_gate tile (gate compute dtype)
    # o_ref : (1, TI, H)     written only on the last j step
    j = pl.program_id(2)

    @pl.when(j == 0)
    def _init():
        num_sc[...] = jnp.zeros_like(num_sc)
        if aggregation == "mean":
            den_sc[...] = jnp.zeros_like(den_sc)

    eg = eg_ref[0]                              # (TI, TJ, H), bf16 or f32
    vx = vx_ref[0]                              # (TJ, H), same dtype
    prod = eg * vx[None, :, :]                  # packed bf16 VALU path when bf16
    num_sc[...] += jnp.sum(prod.astype(jnp.float32), axis=1)
    if aggregation == "mean":
        den_sc[...] += jnp.sum(eg.astype(jnp.float32), axis=1)

    @pl.when(j == pl.num_programs(2) - 1)
    def _finalize():
        ux = ux_ref[0].astype(jnp.float32)
        if aggregation == "mean":
            out = ux + num_sc[...] * pl.reciprocal(1e-20 + den_sc[...],
                                                   approx=True)
        else:  # 'sum'
            out = ux + num_sc[...]
        o_ref[0] = out.astype(o_ref.dtype)


def _tpu_vmem_capacity_bytes():
    try:
        return int(pltpu.get_tpu_info().vmem_capacity_bytes)
    except Exception:
        return 64 * 1024 * 1024   # v7x physical size: the most conservative part


def _choose_tiles(n_pad, h, eg_itemsize, x_itemsize, out_itemsize, aggregation,
                  vmem_budget, tile_cap=4 * 1024 * 1024):
    """Pick (TI, TJ) from padded VMEM footprints (lanes->128, sublane packing)."""
    h_lanes = _round_up(h, 128)
    sub = {4: 8, 2: 16, 1: 32}.get(eg_itemsize, 8)

    def footprint(ti, tj):
        ti_pad = _round_up(ti, 8)
        tj_pad = _round_up(tj, sub)
        eg_tile = ti * tj_pad * h_lanes * eg_itemsize          # (1, TI, TJ, H)
        ux_tile = ti_pad * h_lanes * x_itemsize                # (1, TI, H)
        vx_tile = tj_pad * h_lanes * eg_itemsize               # (1, TJ, H)
        out_tile = ti_pad * h_lanes * out_itemsize             # (1, TI, H)
        scratch = ti_pad * h_lanes * 4 * (2 if aggregation == "mean" else 1)
        total = 2 * (eg_tile + ux_tile + vx_tile + out_tile) + scratch
        return total, eg_tile

    divs8 = [t for t in range(8, n_pad + 1, 8) if n_pad % t == 0]
    ti_cands = sorted([t for t in divs8 if t <= 128], reverse=True) or [n_pad]
    # Prefer sublane-aligned TJ (dense DMA / vreg packing), then the largest.
    tj_cands = sorted(divs8, key=lambda t: (t % sub != 0, -t)) or [n_pad]

    for ti in ti_cands:
        for tj in tj_cands:
            total, eg_tile = footprint(ti, tj)
            if total <= vmem_budget and eg_tile <= tile_cap:
                return ti, tj, total
    ti = tj = 8                                  # n_pad is a multiple of 8
    return ti, tj, footprint(ti, tj)[0]


def node_features(x, edge_gate, u_w, u_b, v_w, v_b, aggregation="mean",
                  gate_dtype=jnp.bfloat16):
    """x: (B, N, H); edge_gate: (B, N, N, H); weights in PyTorch (out, in) layout.

    gate_dtype: compute dtype for the streamed edge_gate / Vx tiles (bf16 by
    default -> halves HBM traffic on this bandwidth-bound kernel; pass
    jnp.float32 for near-bit-accurate results). Accumulation is always f32.
    """
    B, N, H = x.shape
    assert edge_gate.shape == (B, N, N, H)
    assert aggregation in ("mean", "sum")
    out_dtype = x.dtype

    # Hoist the two HxH Linears out of the kernel: small H underfills the MXU
    # and would serialize against the first edge_gate tile of every batch.
    # Extra HBM traffic (2*B*N*H) is negligible vs the B*N^2*H gate stream.
    Ux = x @ u_w.T + u_b                                    # (B, N, H)
    Vx = x @ v_w.T + v_b                                    # (B, N, H)

    g_dtype = jnp.dtype(gate_dtype) if gate_dtype is not None else edge_gate.dtype
    eg = edge_gate.astype(g_dtype)
    Vx = Vx.astype(g_dtype)

    # Pad node axes to a multiple of 8 so every block is sublane-legal.  Zero
    # gate padding contributes nothing to num/den; padded rows are sliced off.
    n_pad = _round_up(N, 8)
    if n_pad != N:
        d = n_pad - N
        eg = jnp.pad(eg, ((0, 0), (0, d), (0, d), (0, 0)))
        Ux = jnp.pad(Ux, ((0, 0), (0, d), (0, 0)))
        Vx = jnp.pad(Vx, ((0, 0), (0, d), (0, 0)))

    cap = _tpu_vmem_capacity_bytes()
    vmem_budget = cap * 3 // 4
    ti, tj, total = _choose_tiles(n_pad, H, eg.dtype.itemsize,
                                  Ux.dtype.itemsize,
                                  jnp.dtype(out_dtype).itemsize,
                                  aggregation, vmem_budget)
    ni, nj = n_pad // ti, n_pad // tj
    vmem_limit = int(min(cap, max(vmem_budget, total + (4 << 20))))

    kernel = functools.partial(_node_features_kernel, aggregation=aggregation)

    scratch = [pltpu.VMEM((ti, H), jnp.float32)]              # num accumulator
    if aggregation == "mean":
        scratch.append(pltpu.VMEM((ti, H), jnp.float32))      # den accumulator

    flops = (3 if aggregation == "mean" else 2) * B * n_pad * n_pad * H
    transcendentals = B * n_pad * H if aggregation == "mean" else 0
    bytes_accessed = (eg.size * eg.dtype.itemsize
                      + Ux.size * Ux.dtype.itemsize
                      + ni * Vx.size * Vx.dtype.itemsize
                      + B * n_pad * H * jnp.dtype(out_dtype).itemsize)

    out = pl.pallas_call(
        kernel,
        out_shape=jax.ShapeDtypeStruct((B, n_pad, H), out_dtype),
        grid_spec=pltpu.PrefetchScalarGridSpec(
            num_scalar_prefetch=0,
            grid=(B, ni, nj),
            in_specs=[
                # Ux: resident across the j reduction axis.
                pl.BlockSpec((1, ti, H), lambda b, i, j: (b, i, 0)),
                # Vx: tile of the neighbor axis for this j step.
                pl.BlockSpec((1, tj, H), lambda b, i, j: (b, j, 0)),
                # edge_gate: streamed (1, TI, TJ, H) tile, read exactly once.
                pl.BlockSpec((1, ti, tj, H), lambda b, i, j: (b, i, j, 0)),
            ],
            out_specs=pl.BlockSpec((1, ti, H), lambda b, i, j: (b, i, 0)),
            scratch_shapes=scratch,
        ),
        compiler_params=pltpu.CompilerParams(
            dimension_semantics=("parallel", "parallel", "arbitrary"),
            vmem_limit_bytes=vmem_limit),
        cost_estimate=pl.CostEstimate(flops=flops,
                                      transcendentals=transcendentals,
                                      bytes_accessed=bytes_accessed),
    )(Ux, Vx, eg)

    return out[:, :N, :]


def node_features_ref(x, edge_gate, u_w, u_b, v_w, v_b, aggregation="mean"):
    """Pure-JAX reference matching the PyTorch forward."""
    Ux = x @ u_w.T + u_b
    Vx = (x @ v_w.T + v_b)[:, None, :, :]          # unsqueeze(1)
    gateVx = edge_gate * Vx
    if aggregation == "mean":
        return Ux + jnp.sum(gateVx, axis=2) / (1e-20 + jnp.sum(edge_gate, axis=2))
    return Ux + jnp.sum(gateVx, axis=2)


if __name__ == "__main__":
    B, N, H = 2, 8, 32
    key = jax.random.PRNGKey(0)
    kx, kg, kuw, kub, kvw, kvb = jax.random.split(key, 6)

    x = jax.random.normal(kx, (B, N, H), dtype=jnp.float32)
    # Edge gates are typically sigmoid outputs -> keep them in (0, 1).
    edge_gate = jax.nn.sigmoid(
        jax.random.normal(kg, (B, N, N, H), dtype=jnp.float32))

    # Deterministic parameter init (shapes from nn.Linear(hidden_dim, hidden_dim)).
    scale = 1.0 / jnp.sqrt(H)
    u_w = jax.random.uniform(kuw, (H, H), jnp.float32, -scale, scale)
    u_b = jax.random.uniform(kub, (H,), jnp.float32, -scale, scale)
    v_w = jax.random.uniform(kvw, (H, H), jnp.float32, -scale, scale)
    v_b = jax.random.uniform(kvb, (H,), jnp.float32, -scale, scale)

    for agg in ("mean", "sum"):
        ref = node_features_ref(x, edge_gate, u_w, u_b, v_w, v_b, aggregation=agg)

        # f32 gate path: tight check (only approx reciprocal / sum order differ).
        out32 = jax.block_until_ready(
            node_features(x, edge_gate, u_w, u_b, v_w, v_b,
                          aggregation=agg, gate_dtype=jnp.float32))
        assert out32.shape == (B, N, H)
        assert jnp.allclose(out32, ref, atol=2e-3, rtol=2e-3), f"f32 mismatch ({agg})"

        # bf16 gate path (production default): loose tolerance for the gate cast.
        outbf = jax.block_until_ready(
            node_features(x, edge_gate, u_w, u_b, v_w, v_b, aggregation=agg))
        assert outbf.shape == (B, N, H)
        assert jnp.allclose(outbf, ref, atol=5e-2, rtol=5e-2), f"bf16 mismatch ({agg})"

    print("KERNEL_OK")
</pallas_src>

<mosaic_0001>
module attributes {stable_mosaic.version = 11 : i64} {
  func.func @_node_features_kernel(%arg0: i32, %arg1: i32, %arg2: i32, %arg3: memref<1x8x32xf32, #tpu.memory_space<vmem>>, %arg4: memref<1x8x32xf32, #tpu.memory_space<vmem>>, %arg5: memref<1x8x8x32xf32, #tpu.memory_space<vmem>>, %arg6: memref<1x8x32xf32, #tpu.memory_space<vmem>>, %arg7: memref<8x32xf32, #tpu.memory_space<vmem>>, %arg8: memref<8x32xf32, #tpu.memory_space<vmem>>) attributes {dimension_semantics = [#tpu.dimension_semantics<parallel>, #tpu.dimension_semantics<parallel>, #tpu.dimension_semantics<arbitrary>], iteration_bounds = array<i64: 2, 1, 1>, scalar_prefetch = 0 : i64, scratch_operands = 2 : i64, tpu.core_type = #tpu.core_type<tc>, window_params = [{transform_indices = @transform_0, window_bounds = array<i64: 1, 8, 32>}, {transform_indices = @transform_1, window_bounds = array<i64: 1, 8, 32>}, {transform_indices = @transform_2, window_bounds = array<i64: 1, 8, 8, 32>}, {transform_indices = @transform_3, window_bounds = array<i64: 1, 8, 32>}]} {
    %c0_i32 = arith.constant 0 : i32
    %0 = arith.cmpi eq, %arg2, %c0_i32 : i32
    %1 = arith.extui %0 : i1 to i32
    %c0_i32_0 = arith.constant 0 : i32
    %2 = arith.cmpi ne, %1, %c0_i32_0 : i32
    scf.if %2 {
      %cst_18 = arith.constant 0.000000e+00 : f32
      %21 = vector.broadcast %cst_18 : f32 to vector<8x32xf32>
      %c0_19 = arith.constant 0 : index
      %c0_20 = arith.constant 0 : index
      %22 = vector.load %arg7[%c0_19, %c0_20] : memref<8x32xf32, #tpu.memory_space<vmem>>, vector<8x32xf32>
      tpu.vector_store %arg7[%c0_19, %c0_20], %21 {strides = array<i32>} : memref<8x32xf32, #tpu.memory_space<vmem>>, vector<8x32xf32>,
      %cst_21 = arith.constant 0.000000e+00 : f32
      %23 = vector.broadcast %cst_21 : f32 to vector<8x32xf32>
      %c0_22 = arith.constant 0 : index
      %c0_23 = arith.constant 0 : index
      %24 = vector.load %arg8[%c0_22, %c0_23] : memref<8x32xf32, #tpu.memory_space<vmem>>, vector<8x32xf32>
      tpu.vector_store %arg8[%c0_22, %c0_23], %23 {strides = array<i32>} : memref<8x32xf32, #tpu.memory_space<vmem>>, vector<8x32xf32>,
    } else {
    }
    %c0 = arith.constant 0 : index
    %c0_1 = arith.constant 0 : index
    %c0_2 = arith.constant 0 : index
    %c0_3 = arith.constant 0 : index
    %3 = vector.load %arg5[%c0, %c0_1, %c0_2, %c0_3] : memref<1x8x8x32xf32, #tpu.memory_space<vmem>>, vector<1x8x8x32xf32>
    %4 = vector.shape_cast %3 : vector<1x8x8x32xf32> to vector<8x8x32xf32>
    %c0_4 = arith.constant 0 : index
    %c0_5 = arith.constant 0 : index
    %c0_6 = arith.constant 0 : index
    %5 = vector.load %arg4[%c0_4, %c0_5, %c0_6] : memref<1x8x32xf32, #tpu.memory_space<vmem>>, vector<1x8x32xf32>
    %6 = vector.shape_cast %5 : vector<1x8x32xf32> to vector<8x32xf32>
    %7 = vector.shape_cast %6 : vector<8x32xf32> to vector<1x8x32xf32>
    %8 = vector.broadcast %7 : vector<1x8x32xf32> to vector<8x8x32xf32>
    %9 = arith.mulf %4, %8 : vector<8x8x32xf32>
    %c0_7 = arith.constant 0 : index
    %c0_8 = arith.constant 0 : index
    %10 = vector.load %arg7[%c0_7, %c0_8] : memref<8x32xf32, #tpu.memory_space<vmem>>, vector<8x32xf32>
    %cst = arith.constant dense<0.000000e+00> : vector<8x32xf32>
    %11 = vector.multi_reduction <add>, %9, %cst [1] : vector<8x8x32xf32> to vector<8x32xf32>
    %12 = arith.addf %10, %11 : vector<8x32xf32>
    %c0_9 = arith.constant 0 : index
    %c0_10 = arith.constant 0 : index
    %13 = vector.load %arg7[%c0_9, %c0_10] : memref<8x32xf32, #tpu.memory_space<vmem>>, vector<8x32xf32>
    tpu.vector_store %arg7[%c0_9, %c0_10], %12 {strides = array<i32>} : memref<8x32xf32, #tpu.memory_space<vmem>>, vector<8x32xf32>,
    %c0_11 = arith.constant 0 : index
    %c0_12 = arith.constant 0 : index
    %14 = vector.load %arg8[%c0_11, %c0_12] : memref<8x32xf32, #tpu.memory_space<vmem>>, vector<8x32xf32>
    %cst_13 = arith.constant dense<0.000000e+00> : vector<8x32xf32>
    %15 = vector.multi_reduction <add>, %4, %cst_13 [1] : vector<8x8x32xf32> to vector<8x32xf32>
    %16 = arith.addf %14, %15 : vector<8x32xf32>
    %c0_14 = arith.constant 0 : index
    %c0_15 = arith.constant 0 : index
    %17 = vector.load %arg8[%c0_14, %c0_15] : memref<8x32xf32, #tpu.memory_space<vmem>>, vector<8x32xf32>
    tpu.vector_store %arg8[%c0_14, %c0_15], %16 {strides = array<i32>} : memref<8x32xf32, #tpu.memory_space<vmem>>, vector<8x32xf32>,
    %c0_i32_16 = arith.constant 0 : i32
    %18 = arith.cmpi eq, %arg2, %c0_i32_16 : i32
    %19 = arith.extui %18 : i1 to i32
    %c0_i32_17 = arith.constant 0 : i32
    %20 = arith.cmpi ne, %19, %c0_i32_17 : i32
    scf.if %20 {
      %c0_18 = arith.constant 0 : index
      %c0_19 = arith.constant 0 : index
      %c0_20 = arith.constant 0 : index
      %21 = vector.load %arg3[%c0_18, %c0_19, %c0_20] : memref<1x8x32xf32, #tpu.memory_space<vmem>>, vector<1x8x32xf32>
      %22 = vector.shape_cast %21 : vector<1x8x32xf32> to vector<8x32xf32>
      %c0_21 = arith.constant 0 : index
      %c0_22 = arith.constant 0 : index
      %23 = vector.load %arg7[%c0_21, %c0_22] : memref<8x32xf32, #tpu.memory_space<vmem>>, vector<8x32xf32>
      %c0_23 = arith.constant 0 : index
      %c0_24 = arith.constant 0 : index
      %24 = vector.load %arg8[%c0_23, %c0_24] : memref<8x32xf32, #tpu.memory_space<vmem>>, vector<8x32xf32>
      %cst_25 = arith.constant 9.99999968E-21 : f32
      %25 = vector.broadcast %cst_25 : f32 to vector<8x32xf32>
      %26 = arith.addf %25, %24 : vector<8x32xf32>
      %27 = tpu.reciprocal %26 {approx = true} : vector<8x32xf32> -> vector<8x32xf32>
      %28 = arith.mulf %23, %27 : vector<8x32xf32>
      %29 = arith.addf %22, %28 : vector<8x32xf32>
      %c0_26 = arith.constant 0 : index
      %c0_27 = arith.constant 0 : index
      %c0_28 = arith.constant 0 : index
      %30 = vector.load %arg6[%c0_26, %c0_27, %c0_28] : memref<1x8x32xf32, #tpu.memory_space<vmem>>, vector<1x8x32xf32>
      %31 = vector.shape_cast %30 : vector<1x8x32xf32> to vector<8x32xf32>
      %32 = vector.shape_cast %29 : vector<8x32xf32> to vector<1x8x32xf32>
      tpu.vector_store %arg6[%c0_26, %c0_27, %c0_28], %32 {strides = array<i32>} : memref<1x8x32xf32, #tpu.memory_space<vmem>>, vector<1x8x32xf32>,
    } else {
    }
    return
  }
  func.func @transform_0(%arg0: i32, %arg1: i32, %arg2: i32) -> (i32, i32, i32) {
    %c0_i32 = arith.constant 0 : i32
    %c0_i32_0 = arith.constant 0 : i32
    return %arg0, %arg1, %c0_i32 : i32, i32, i32
  }
  func.func @transform_1(%arg0: i32, %arg1: i32, %arg2: i32) -> (i32, i32, i32) {
    %c0_i32 = arith.constant 0 : i32
    %c0_i32_0 = arith.constant 0 : i32
    return %arg0, %arg2, %c0_i32 : i32, i32, i32
  }
  func.func @transform_2(%arg0: i32, %arg1: i32, %arg2: i32) -> (i32, i32, i32, i32) {
    %c0_i32 = arith.constant 0 : i32
    %c0_i32_0 = arith.constant 0 : i32
    return %arg0, %arg1, %arg2, %c0_i32 : i32, i32, i32, i32
  }
  func.func @transform_3(%arg0: i32, %arg1: i32, %arg2: i32) -> (i32, i32, i32) {
    %c0_i32 = arith.constant 0 : i32
    %c0_i32_0 = arith.constant 0 : i32
    return %arg0, %arg1, %c0_i32 : i32, i32, i32
  }
}

</mosaic_0001>

<llo_original>
// kernel: tpu_custom_call.1
$region0: #{tpu_custom_call.1}
  #allocation0 [shape = 'u32[]', space=smem, size = 0x4, offset = 0x4, fixed_abs, tag = 'smem constant byte address 0x4 - core index']
  #allocation1 [shape = 'u32[72,128]{1,0:T(1,128)}', space=vmem, size = 0x9000, scoped, tag = 'internal scratch']
  #allocation2 [shape = 'f32[8,32]{1,0:T(8,128)}', space=vmem, size = 0x1000, scoped, tag = 'scratch operand']
  #allocation3 [shape = 'f32[8,32]{1,0:T(8,128)}', space=vmem, size = 0x1000, scoped, tag = 'scratch operand']
  %s0 = inlined_call_operand.hbm [shape: f32[2,8,32], index: 0, kind: input, shape index: {}]
  %s1 = inlined_call_operand.hbm [shape: f32[2,8,32], index: 1, kind: input, shape index: {}]
  %s2 = inlined_call_operand.hbm [shape: f32[2,8,8,32], index: 2, kind: input, shape index: {}]
  %s3 = inlined_call_operand.hbm [shape: f32[2,8,32], index: 3, kind: output, shape index: {}]
  %s4 = sld [smem:[#allocation0]]
  $region65: #{tpu_custom_call.1} parent=0
    _
  %s6 = ssub.s32 1, %s4
  %s7 = scalar_select 0, %s6, %s4
  $region1: #{tpu_custom_call.1} parent=0
    #allocation4 [shape = 'u8[8192]{0}', space=vmem, size = 0x2000, scoped, tag = 'input window, operand 0']
    #allocation5 [shape = 's32[2]{0}', space=sflag, size = 0x8, scoped, tag = 'scoped memory for tpu_custom_call.1']
    #allocation6 [shape = 's32[2]{0}', space=sflag, size = 0x8, scoped, tag = 'scoped memory for tpu_custom_call.1']
    #allocation7 [shape = 'u8[8192]{0}', space=vmem, size = 0x2000, scoped, tag = 'input window, operand 1']
    #allocation8 [shape = 's32[2]{0}', space=sflag, size = 0x8, scoped, tag = 'scoped memory for tpu_custom_call.1']
    #allocation9 [shape = 'u8[65536]{0}', space=vmem, size = 0x10000, scoped, tag = 'input window, operand 2']
    #allocation10 [shape = 'u8[8192]{0}', space=vmem, size = 0x2000, scoped, tag = 'output window, operand 0']
    %8 = vsyncpa [#allocation5], 0
    %s9 = scalar_lea.sflag [#allocation5], 1
    %10 = vsyncpa %s9, 0
    %11 = vsyncpa [#allocation8], 0
    %s12 = scalar_lea.sflag [#allocation8], 1
    %13 = vsyncpa %s12, 0
    %14 = vsyncpa [#allocation6], 0
    %s15 = scalar_lea.sflag [#allocation6], 1
    %16 = vsyncpa %s15, 0
    loop: start=0, step=1, limit=4
    $region2: #{tpu_custom_call.1} parent=1 // loop_pre_header
      _
    $region3: #{tpu_custom_call.1} parent=1 // loop_header
      %s18 = sphi 0, %s22
      %p19 = scmp.ge.s32.totalorder %s18, 4
      %s25 = sphi 0, %s44
      %s26 = sphi 0, %s40
      %s27 = sphi 0, %s36
      %s28 = sphi 0, %s25
      %s29 = sphi 0, %s26
      %s30 = sphi 0, %s27
      %s31 = sphi 0, %s28
      %s32 = sphi 0, %s29
      %s33 = sphi 0, %s30
      %s49 = sphi 0, %s51
      %s52 = sphi 0, %s49
      %s53 = sphi 0, %s52
      %s69 = sphi 0, %s53
      %s77 = sphi 0, %s79
      %s80 = sphi 0, %s77
      %s81 = sphi 0, %s80
      %s97 = sphi 0, %s81
      %s107 = sphi 0, %s109
      %s110 = sphi 0, %s107
      %s111 = sphi 0, %s110
      %s127 = sphi 0, %s111
      %s135 = sphi 0, %s137
      %s138 = sphi 0, %s135
      %s139 = sphi 0, %s138
      %s155 = sphi 0, %s139
    $region4: #{tpu_custom_call.1} parent=1 // loop_header_branch
      %21 = sbr.rel (%p19) target = $region8
    $region5: #{tpu_custom_call.1} parent=1 // loop_body
      %s23 = ssub.s32 %s18, 1
      %s24 = ssub.s32 %s18, 2
      %s34 = sadd.s32 1, %s27
      %p35 = scmp.ge.s32.totalorder %s34, 1
      %s36 = scalar_select %p35, 0, %s34
      %s37 = sadd.s32 1, %s26
      %s38 = scalar_select %p35, %s37, %s26
      %p39 = scmp.ge.s32.totalorder %s38, 1
      %s40 = scalar_select %p39, 0, %s38
      %s41 = sadd.s32 1, %s25
      %s42 = scalar_select %p39, %s41, %s25
      %p43 = scmp.ge.s32.totalorder %s42, 2
      %s44 = scalar_select %p43, 0, %s42
      %s45 = ssub.s32 %s25, %s44
      %s46 = ssub.s32 %s26, %s40
      %s47 = sor.u32 %s45, %s46
      %p48 = scmp.eq.s32.totalorder %s47, 0
      %s50 = sadd.s32 %s49, 1
      %s51 = scalar_select %p48, %s49, %s50
      %p54 = pneg %p48
      %p55 = scmp.eq.s32.totalorder %s18, 1
      %p56 = por %p54, %p55
      %p57 = scmp.ne.s32.totalorder %s49, %s52
      %p58 = scmp.eq.s32.totalorder %s18, 0
      %p59 = por %p57, %p58
      %p60 = scmp.ne.s32.totalorder %s49, %s52
      %p61 = scmp.eq.s32.totalorder %s23, 1
      %p62 = por %p60, %p61
      %p63 = scmp.ne.s32.totalorder %s52, %s53
      %p64 = scmp.eq.s32.totalorder %s23, 0
      %p65 = por %p63, %p64
      %p66 = scmp.ne.s32.totalorder %s52, %s53
      %p67 = scmp.eq.s32.totalorder %s24, 1
      %p68 = por %p66, %p67
      %p70 = scmp.ne.s32.totalorder %s53, %s69
      %p71 = scmp.eq.s32.totalorder %s24, 0
      %p72 = por %p70, %p71
      %s73 = ssub.s32 %s25, %s44
      %s74 = ssub.s32 %s27, %s36
      %s75 = sor.u32 %s73, %s74
      %p76 = scmp.eq.s32.totalorder %s75, 0
      %s78 = sadd.s32 %s77, 1
      %s79 = scalar_select %p76, %s77, %s78
      %p82 = pneg %p76
      %p83 = scmp.eq.s32.totalorder %s18, 1
      %p84 = por %p82, %p83
      %p85 = scmp.ne.s32.totalorder %s77, %s80
      %p86 = scmp.eq.s32.totalorder %s18, 0
      %p87 = por %p85, %p86
      %p88 = scmp.ne.s32.totalorder %s77, %s80
      %p89 = scmp.eq.s32.totalorder %s23, 1
      %p90 = por %p88, %p89
      %p91 = scmp.ne.s32.totalorder %s80, %s81
      %p92 = scmp.eq.s32.totalorder %s23, 0
      %p93 = por %p91, %p92
      %p94 = scmp.ne.s32.totalorder %s80, %s81
      %p95 = scmp.eq.s32.totalorder %s24, 1
      %p96 = por %p94, %p95
      %p98 = scmp.ne.s32.totalorder %s81, %s97
      %p99 = scmp.eq.s32.totalorder %s24, 0
      %p100 = por %p98, %p99
      %s101 = ssub.s32 %s25, %s44
      %s102 = ssub.s32 %s26, %s40
      %s103 = sor.u32 %s101, %s102
      %s104 = ssub.s32 %s27, %s36
      %s105 = sor.u32 %s103, %s104
      %p106 = scmp.eq.s32.totalorder %s105, 0
      %s108 = sadd.s32 %s107, 1
      %s109 = scalar_select %p106, %s107, %s108
      %p112 = pneg %p106
      %p113 = scmp.eq.s32.totalorder %s18, 1
      %p114 = por %p112, %p113
      %p115 = scmp.ne.s32.totalorder %s107, %s110
      %p116 = scmp.eq.s32.totalorder %s18, 0
      %p117 = por %p115, %p116
      %p118 = scmp.ne.s32.totalorder %s107, %s110
      %p119 = scmp.eq.s32.totalorder %s23, 1
      %p120 = por %p118, %p119
      %p121 = scmp.ne.s32.totalorder %s110, %s111
      %p122 = scmp.eq.s32.totalorder %s23, 0
      %p123 = por %p121, %p122
      %p124 = scmp.ne.s32.totalorder %s110, %s111
      %p125 = scmp.eq.s32.totalorder %s24, 1
      %p126 = por %p124, %p125
      %p128 = scmp.ne.s32.totalorder %s111, %s127
      %p129 = scmp.eq.s32.totalorder %s24, 0
      %p130 = por %p128, %p129
      %s131 = ssub.s32 %s25, %s44
      %s132 = ssub.s32 %s26, %s40
      %s133 = sor.u32 %s131, %s132
      %p134 = scmp.eq.s32.totalorder %s133, 0
      %s136 = sadd.s32 %s135, 1
      %s137 = scalar_select %p134, %s135, %s136
      %p140 = pneg %p134
      %p141 = scmp.eq.s32.totalorder %s18, 1
      %p142 = por %p140, %p141
      %p143 = scmp.ne.s32.totalorder %s135, %s138
      %p144 = scmp.eq.s32.totalorder %s18, 0
      %p145 = por %p143, %p144
      %p146 = scmp.ne.s32.totalorder %s135, %s138
      %p147 = scmp.eq.s32.totalorder %s23, 1
      %p148 = por %p146, %p147
      %p149 = scmp.ne.s32.totalorder %s138, %s139
      %p150 = scmp.eq.s32.totalorder %s23, 0
      %p151 = por %p149, %p150
      %p152 = scmp.ne.s32.totalorder %s138, %s139
      %p153 = scmp.eq.s32.totalorder %s24, 1
      %p154 = por %p152, %p153
      %p156 = scmp.ne.s32.totalorder %s139, %s155
      %p157 = scmp.eq.s32.totalorder %s24, 0
      %p158 = por %p156, %p157
      %p159 = scmp.le.s32.totalorder 1, %s18
      %p160 = scmp.lt.s32.totalorder %s18, 3
      %p161 = pnand %p159, %p160
      %p162 = pneg %p161
      // Predicated region
      $region9: #{tpu_custom_call.1} parent=5 // pred_check
        _
      $region10: #{tpu_custom_call.1} parent=5 // pred_check_branch
        %164 = sbr.rel (%p161) target = $region12
      $region11: #{tpu_custom_call.1} parent=5 // pred_region
        %s165 = ssub.s32 %s18, 1
      $region12: #{tpu_custom_call.1} parent=5 // pred_fallthru
        _
      %p166 = scmp.lt.s32.totalorder %s18, 2
      // Predicated region
      $region13: #{tpu_custom_call.1} parent=5 // pred_check
        %p167 = pneg %p166
      $region14: #{tpu_custom_call.1} parent=5 // pred_check_branch
        %169 = sbr.rel (%p167) target = $region16
      $region15: #{tpu_custom_call.1} parent=5 // pred_region
        // Predicated region
        $region17: #{tpu_custom_call.1} parent=15 // pred_check
          %p170 = pneg %p59
        $region18: #{tpu_custom_call.1} parent=15 // pred_check_branch
          %172 = sbr.rel (%p170) target = $region20
        $region19: #{tpu_custom_call.1} parent=15 // pred_region
          %s173 = sand.u32 %s49, 1
          %s174 = scalar_lea.sflag [#allocation5], %s173
          %s175 = sand.u32 %s49, 1
          %s176 = smul.addr %s175, 8
          %s177 = scalar_lea.vmem [#allocation4], %s176
          %179 = vsyncadd %s174, 0
          %s180 = sadd.s32 %s26, %s25
          %s181 = smul.addr %s180, 8
          %s182 = scalar_lea.hbm %s0, %s181
          %s184 = sshll.u32 %s182, 4
          %s185 = int_to_ptr.hbm [resolvable:$true] %s184
          %s186 = sshll.u32 %s177, 4
          %s187 = int_to_ptr.vmem [resolvable:$true] %s186
          %189 = dma.hbm_to_vmem [thread:$0]  %s185, 128, %s187, %s174
        $region20: #{tpu_custom_call.1} parent=15 // pred_fallthru
          _
        // Predicated region
        $region21: #{tpu_custom_call.1} parent=15 // pred_check
          %p190 = pneg %p87
        $region22: #{tpu_custom_call.1} parent=15 // pred_check_branch
          %192 = sbr.rel (%p190) target = $region24
        $region23: #{tpu_custom_call.1} parent=15 // pred_region
          %s193 = sand.u32 %s18, 1
          %s194 = scalar_lea.sflag [#allocation8], %s193
          %s195 = sand.u32 %s77, 1
          %s196 = smul.addr %s195, 8
          %s197 = scalar_lea.vmem [#allocation7], %s196
          %199 = vsyncadd %s194, 0
          %s200 = sadd.s32 %s27, %s25
          %s201 = smul.addr %s200, 8
          %s202 = scalar_lea.hbm %s1, %s201
          %s204 = sshll.u32 %s202, 4
          %s205 = int_to_ptr.hbm [resolvable:$true] %s204
          %s206 = sshll.u32 %s197, 4
          %s207 = int_to_ptr.vmem [resolvable:$true] %s206
          %209 = dma.hbm_to_vmem [thread:$0]  %s205, 128, %s207, %s194
        $region24: #{tpu_custom_call.1} parent=15 // pred_fallthru
          _
        // Predicated region
        $region25: #{tpu_custom_call.1} parent=15 // pred_check
          %p210 = pneg %p117
        $region26: #{tpu_custom_call.1} parent=15 // pred_check_branch
          %212 = sbr.rel (%p210) target = $region28
        $region27: #{tpu_custom_call.1} parent=15 // pred_region
          %s213 = sand.u32 %s18, 1
          %s214 = scalar_lea.sflag [#allocation8], %s213
          %s215 = sand.u32 %s107, 1
          %s216 = smul.addr %s215, 64
          %s217 = scalar_lea.vmem [#allocation9], %s216
          %s218 = smul.u32 8, %s26
          %220 = vsyncadd %s214, 0
          %s221 = sadd.s32 %s27, %s218
          %s222 = smul.addr %s25, 8
          %s223 = sadd.s32 %s221, %s222
          %s224 = smul.addr %s223, 8
          %s225 = scalar_lea.hbm %s2, %s224
          %s226 = sshll.u32 %s225, 4
          %s227 = int_to_ptr.hbm [resolvable:$true] %s226
          %s228 = sshll.u32 %s217, 4
          %s229 = int_to_ptr.vmem [resolvable:$true] %s228
          %234 = dma.hbm_to_vmem [thread:$0]  %s227, 1024, %s229, %s214, 128, 128, 8
        $region28: #{tpu_custom_call.1} parent=15 // pred_fallthru
          _
      $region16: #{tpu_custom_call.1} parent=5 // pred_fallthru
        _
      %p235 = scmp.le.s32.totalorder 1, %s18
      %p236 = scmp.lt.s32.totalorder %s18, 3
      %p237 = pnand %p235, %p236
      %p238 = pneg %p237
      // Predicated region
      $region29: #{tpu_custom_call.1} parent=5 // pred_check
        _
      $region30: #{tpu_custom_call.1} parent=5 // pred_check_branch
        %240 = sbr.rel (%p237) target = $region32
      $region31: #{tpu_custom_call.1} parent=5 // pred_region
        %s241 = ssub.s32 %s18, 1
        %s242 = sand.u32 %s52, 1
        %s243 = scalar_lea.sflag [#allocation5], %s242
        %s244 = sand.u32 %s52, 1
        %s245 = smul.addr %s244, 8
        %s246 = scalar_lea.vmem [#allocation4], %s245
        // Predicated region
        $region33: #{tpu_custom_call.1} parent=31 // pred_check
          %p247 = pneg %p65
        $region34: #{tpu_custom_call.1} parent=31 // pred_check_branch
          %249 = sbr.rel (%p247) target = $region36
        $region35: #{tpu_custom_call.1} parent=31 // pred_region
          %251 = dma.done %s243, 128
        $region36: #{tpu_custom_call.1} parent=31 // pred_fallthru
          _
        %s252 = sand.u32 %s23, 1
        %s253 = scalar_lea.sflag [#allocation8], %s252
        %s254 = sand.u32 %s80, 1
        %s255 = smul.addr %s254, 8
        %s256 = scalar_lea.vmem [#allocation7], %s255
        // Predicated region
        $region37: #{tpu_custom_call.1} parent=31 // pred_check
          %p257 = pneg %p93
        $region38: #{tpu_custom_call.1} parent=31 // pred_check_branch
          %259 = sbr.rel (%p257) target = $region40
        $region39: #{tpu_custom_call.1} parent=31 // pred_region
          %261 = dma.done %s253, 128
        $region40: #{tpu_custom_call.1} parent=31 // pred_fallthru
          _
        %s262 = sand.u32 %s23, 1
        %s263 = scalar_lea.sflag [#allocation8], %s262
        %s264 = sand.u32 %s110, 1
        %s265 = smul.addr %s264, 64
        %s266 = scalar_lea.vmem [#allocation9], %s265
        // Predicated region
        $region41: #{tpu_custom_call.1} parent=31 // pred_check
          %p267 = pneg %p123
        $region42: #{tpu_custom_call.1} parent=31 // pred_check_branch
          %269 = sbr.rel (%p267) target = $region44
        $region43: #{tpu_custom_call.1} parent=31 // pred_region
          %271 = dma.done %s263, 1024
        $region44: #{tpu_custom_call.1} parent=31 // pred_fallthru
          _
        %s272 = sand.u32 %s52, 1
        %s273 = scalar_lea.sflag [#allocation5], %s272
        %s274 = sand.u32 %s52, 1
        %s275 = smul.addr %s274, 8
        %s276 = scalar_lea.vmem [#allocation4], %s275
        %p277 = pneg %p65
        %p278 = pneg %p62
        %s279 = sand.u32 %s23, 1
        %s280 = scalar_lea.sflag [#allocation8], %s279
        %s281 = sand.u32 %s80, 1
        %s282 = smul.addr %s281, 8
        %s283 = scalar_lea.vmem [#allocation7], %s282
        %p284 = pneg %p93
        %p285 = pneg %p90
        %s286 = sand.u32 %s23, 1
        %s287 = scalar_lea.sflag [#allocation8], %s286
        %s288 = sand.u32 %s110, 1
        %s289 = smul.addr %s288, 64
        %s290 = scalar_lea.vmem [#allocation9], %s289
        %p291 = pneg %p123
        %p292 = pneg %p120
        %p293 = pneg %p151
        %p294 = pneg %p148
        %s295 = sand.u32 %s138, 1
        %s296 = scalar_lea.sflag [#allocation6], %s295
        %s297 = sand.u32 %s138, 1
        %s298 = smul.addr %s297, 8
        %s299 = scalar_lea.vmem [#allocation10], %s298
        %s300 = smul.u32 8, %s29
        %p301 = scmp.eq.s32.totalorder %s30, 0
        // Predicated region
        $region45: #{tpu_custom_call.1} parent=31 // pred_check
          %p302 = pneg %p301
        $region46: #{tpu_custom_call.1} parent=31 // pred_check_branch
          %304 = sbr.rel (%p302) target = $region48
        $region47: #{tpu_custom_call.1} parent=31 // pred_region
          %vm305 = vcmask 261120
          %306 = vst.msk [vmem:[#allocation2] sm:$0xff] %vm305, 0.0
          %307 = vst.msk [vmem:[#allocation3] sm:$0xff] %vm305, 0.0
        $region48: #{tpu_custom_call.1} parent=31 // pred_fallthru
          _
        %v308 = vld [vmem:[%s266] sm:$0xff]
        %v309 = vld [vmem:[%s266 + $0x8] sm:$0xff]
        %v310 = vld [vmem:[%s266 + $0x10] sm:$0xff]
        %v311 = vld [vmem:[%s266 + $0x18] sm:$0xff]
        %v312 = vld [vmem:[%s266 + $0x20] sm:$0xff]
        %v313 = vld [vmem:[%s266 + $0x28] sm:$0xff]
        %v314 = vld [vmem:[%s266 + $0x30] sm:$0xff]
        %v315 = vld [vmem:[%s266 + $0x38] sm:$0xff]
        %v316 = vld [vmem:[%s256] sm:$0xff]
        %v317 = vmul.f32 %v308, %v316
        %v318 = vmul.f32 %v309, %v316
        %v319 = vmul.f32 %v310, %v316
        %v320 = vmul.f32 %v311, %v316
        %v321 = vmul.f32 %v312, %v316
        %v322 = vmul.f32 %v313, %v316
        %v323 = vmul.f32 %v314, %v316
        %v324 = vmul.f32 %v315, %v316
        %v325 = vld [vmem:[#allocation2] sm:$0xff]
        %vm326 = vcmask 261120
        %v327 = vsel %vm326, %v317, 0.0
        %v328 = vrot.slane %v327, 4
        %v329 = vadd.f32 %v327, %v328
        %v330 = vrot.slane %v329, 2
        %v331 = vadd.f32 %v329, %v330
        %v332 = vrot.slane %v331, 1
        %v333 = vadd.f32 %v331, %v332
        %v334 = vsel %vm326, %v318, 0.0
        %v335 = vrot.slane %v334, 4
        %v336 = vadd.f32 %v334, %v335
        %v337 = vrot.slane %v336, 2
        %v338 = vadd.f32 %v336, %v337
        %v339 = vrot.slane %v338, 1
        %v340 = vadd.f32 %v338, %v339
        %v341 = vsel %vm326, %v319, 0.0
        %v342 = vrot.slane %v341, 4
        %v343 = vadd.f32 %v341, %v342
        %v344 = vrot.slane %v343, 2
        %v345 = vadd.f32 %v343, %v344
        %v346 = vrot.slane %v345, 1
        %v347 = vadd.f32 %v345, %v346
        %v348 = vsel %vm326, %v320, 0.0
        %v349 = vrot.slane %v348, 4
        %v350 = vadd.f32 %v348, %v349
        %v351 = vrot.slane %v350, 2
        %v352 = vadd.f32 %v350, %v351
        %v353 = vrot.slane %v352, 1
        %v354 = vadd.f32 %v352, %v353
        %v355 = vsel %vm326, %v321, 0.0
        %v356 = vrot.slane %v355, 4
        %v357 = vadd.f32 %v355, %v356
        %v358 = vrot.slane %v357, 2
        %v359 = vadd.f32 %v357, %v358
        %v360 = vrot.slane %v359, 1
        %v361 = vadd.f32 %v359, %v360
        %v362 = vsel %vm326, %v322, 0.0
        %v363 = vrot.slane %v362, 4
        %v364 = vadd.f32 %v362, %v363
        %v365 = vrot.slane %v364, 2
        %v366 = vadd.f32 %v364, %v365
        %v367 = vrot.slane %v366, 1
        %v368 = vadd.f32 %v366, %v367
        %v369 = vsel %vm326, %v323, 0.0
        %v370 = vrot.slane %v369, 4
        %v371 = vadd.f32 %v369, %v370
        %v372 = vrot.slane %v371, 2
        %v373 = vadd.f32 %v371, %v372
        %v374 = vrot.slane %v373, 1
        %v375 = vadd.f32 %v373, %v374
        %v376 = vsel %vm326, %v324, 0.0
        %v377 = vrot.slane %v376, 4
        %v378 = vadd.f32 %v376, %v377
        %v379 = vrot.slane %v378, 2
        %v380 = vadd.f32 %v378, %v379
        %v381 = vrot.slane %v380, 1
        %v382 = vadd.f32 %v380, %v381
        %vm391 = vcmask 1041409
        %v392 = vsel %vm391, %v340, %v333
        %vm393 = vcmask 1042434
        %v394 = vsel %vm393, %v347, %v392
        %vm395 = vcmask 1043459
        %v396 = vsel %vm395, %v354, %v394
        %vm397 = vcmask 1044484
        %v398 = vsel %vm397, %v361, %v396
        %vm399 = vcmask 1045509
        %v400 = vsel %vm399, %v368, %v398
        %vm401 = vcmask 1046534
        %v402 = vsel %vm401, %v375, %v400
        %vm403 = vcmask 1047559
        %v404 = vsel %vm403, %v382, %v402
        %v406 = vadd.f32 %v325, %v404
        %407 = vst.msk [vmem:[#allocation2] sm:$0xff] %vm326, %v406
        %v408 = vld [vmem:[#allocation3] sm:$0xff]
        %v409 = vsel %vm326, %v308, 0.0
        %v410 = vrot.slane %v409, 4
        %v411 = vadd.f32 %v409, %v410
        %v412 = vrot.slane %v411, 2
        %v413 = vadd.f32 %v411, %v412
        %v414 = vrot.slane %v413, 1
        %v415 = vadd.f32 %v413, %v414
        %v416 = vsel %vm326, %v309, 0.0
        %v417 = vrot.slane %v416, 4
        %v418 = vadd.f32 %v416, %v417
        %v419 = vrot.slane %v418, 2
        %v420 = vadd.f32 %v418, %v419
        %v421 = vrot.slane %v420, 1
        %v422 = vadd.f32 %v420, %v421
        %v423 = vsel %vm326, %v310, 0.0
        %v424 = vrot.slane %v423, 4
        %v425 = vadd.f32 %v423, %v424
        %v426 = vrot.slane %v425, 2
        %v427 = vadd.f32 %v425, %v426
        %v428 = vrot.slane %v427, 1
        %v429 = vadd.f32 %v427, %v428
        %v430 = vsel %vm326, %v311, 0.0
        %v431 = vrot.slane %v430, 4
        %v432 = vadd.f32 %v430, %v431
        %v433 = vrot.slane %v432, 2
        %v434 = vadd.f32 %v432, %v433
        %v435 = vrot.slane %v434, 1
        %v436 = vadd.f32 %v434, %v435
        %v437 = vsel %vm326, %v312, 0.0
        %v438 = vrot.slane %v437, 4
        %v439 = vadd.f32 %v437, %v438
        %v440 = vrot.slane %v439, 2
        %v441 = vadd.f32 %v439, %v440
        %v442 = vrot.slane %v441, 1
        %v443 = vadd.f32 %v441, %v442
        %v444 = vsel %vm326, %v313, 0.0
        %v445 = vrot.slane %v444, 4
        %v446 = vadd.f32 %v444, %v445
        %v447 = vrot.slane %v446, 2
        %v448 = vadd.f32 %v446, %v447
        %v449 = vrot.slane %v448, 1
        %v450 = vadd.f32 %v448, %v449
        %v451 = vsel %vm326, %v314, 0.0
        %v452 = vrot.slane %v451, 4
        %v453 = vadd.f32 %v451, %v452
        %v454 = vrot.slane %v453, 2
        %v455 = vadd.f32 %v453, %v454
        %v456 = vrot.slane %v455, 1
        %v457 = vadd.f32 %v455, %v456
        %v458 = vsel %vm326, %v315, 0.0
        %v459 = vrot.slane %v458, 4
        %v460 = vadd.f32 %v458, %v459
        %v461 = vrot.slane %v460, 2
        %v462 = vadd.f32 %v460, %v461
        %v463 = vrot.slane %v462, 1
        %v464 = vadd.f32 %v462, %v463
        %v473 = vsel %vm391, %v422, %v415
        %v474 = vsel %vm393, %v429, %v473
        %v475 = vsel %vm395, %v436, %v474
        %v476 = vsel %vm397, %v443, %v475
        %v477 = vsel %vm399, %v450, %v476
        %v478 = vsel %vm401, %v457, %v477
        %v479 = vsel %vm403, %v464, %v478
        %v481 = vadd.f32 %v408, %v479
        %482 = vst.msk [vmem:[#allocation3] sm:$0xff] %vm326, %v481
        // Predicated region
        $region49: #{tpu_custom_call.1} parent=31 // pred_check
          %p483 = pneg %p301
        $region50: #{tpu_custom_call.1} parent=31 // pred_check_branch
          %485 = sbr.rel (%p483) target = $region52
        $region51: #{tpu_custom_call.1} parent=31 // pred_region
          %v486 = vld [vmem:[%s246] sm:$0xff]
          %v487 = vld [vmem:[#allocation2] sm:$0xff]
          %v488 = vld [vmem:[#allocation3] sm:$0xff]
          %v489 = vadd.f32 %v488, 1e-20
          %v490 = vrcp.pop %v489
          %v491 = vmul.f32 %v487, %v490
          %v492 = vadd.f32 %v486, %v491
          %493 = vst.msk [vmem:[%s299] sm:$0xff] %vm326, %v492
        $region52: #{tpu_custom_call.1} parent=31 // pred_fallthru
          _
        %s494 = sand.u32 %s138, 1
        %s495 = scalar_lea.sflag [#allocation6], %s494
        %s496 = sand.u32 %s138, 1
        %s497 = smul.addr %s496, 8
        %s498 = scalar_lea.vmem [#allocation10], %s497
        // Predicated region
        $region53: #{tpu_custom_call.1} parent=31 // pred_check
          %p499 = pneg %p148
        $region54: #{tpu_custom_call.1} parent=31 // pred_check_branch
          %501 = sbr.rel (%p499) target = $region56
        $region55: #{tpu_custom_call.1} parent=31 // pred_region
          %503 = vsyncadd %s495, 0
          %s504 = sadd.s32 %s29, %s28
          %s505 = smul.addr %s504, 8
          %s506 = scalar_lea.hbm %s3, %s505
          %s508 = sshll.u32 %s498, 4
          %s509 = int_to_ptr.vmem [resolvable:$true] %s508
          %s510 = sshll.u32 %s506, 4
          %s511 = int_to_ptr.hbm [resolvable:$true] %s510
          %513 = dma.vmem_to_hbm [thread:$0]  %s509, 128, %s511, %s495
        $region56: #{tpu_custom_call.1} parent=31 // pred_fallthru
          _
      $region32: #{tpu_custom_call.1} parent=5 // pred_fallthru
        _
      %p514 = scmp.le.s32.totalorder 2, %s18
      // Predicated region
      $region57: #{tpu_custom_call.1} parent=5 // pred_check
        %p515 = pneg %p514
      $region58: #{tpu_custom_call.1} parent=5 // pred_check_branch
        %517 = sbr.rel (%p515) target = $region60
      $region59: #{tpu_custom_call.1} parent=5 // pred_region
        %s518 = ssub.s32 %s18, 2
        // Predicated region
        $region61: #{tpu_custom_call.1} parent=59 // pred_check
          %p519 = pneg %p154
        $region62: #{tpu_custom_call.1} parent=59 // pred_check_branch
          %521 = sbr.rel (%p519) target = $region64
        $region63: #{tpu_custom_call.1} parent=59 // pred_region
          %s522 = sand.u32 %s139, 1
          %s523 = scalar_lea.sflag [#allocation6], %s522
          %s524 = sand.u32 %s139, 1
          %s525 = smul.addr %s524, 8
          %s526 = scalar_lea.vmem [#allocation10], %s525
          %528 = dma.done %s523, 128
        $region64: #{tpu_custom_call.1} parent=59 // pred_fallthru
          _
      $region60: #{tpu_custom_call.1} parent=5 // pred_fallthru
        _
    $region6: #{tpu_custom_call.1} parent=1 // loop_footer
      %s22 = sadd.s32 1, %s18
    $region7: #{tpu_custom_call.1} parent=1 // loop_footer_branch
      %17 = sbr.rel target = $region3
    $region8: #{tpu_custom_call.1} parent=1 // loop_exit
      _
    %529 = vsyncpa [#allocation5], 1
    %s530 = scalar_lea.sflag [#allocation5], 1
    %531 = vsyncpa %s530, 1
    %532 = vsyncpa [#allocation8], 1
    %s533 = scalar_lea.sflag [#allocation8], 1
    %534 = vsyncpa %s533, 1
    %535 = vsyncpa [#allocation6], 1
    %s536 = scalar_lea.sflag [#allocation6], 1
    %537 = vsyncpa %s536, 1

</llo_original>
